<compile_context>
chip_gen: v7x
topology: tpu7x:2x2x1
jax: 0.10.0
libtpu: 0.0.40
codegen_flags: <defaults>
</compile_context>

<pallas_src>
import functools

import jax
import jax.numpy as jnp
from jax.experimental import pallas as pl
from jax.experimental.pallas import tpu as pltpu


def _round_up(x, m):
    return (x + m - 1) // m * m


_ACTIVATIONS = {
    "tanh": jnp.tanh,
    "relu": lambda x: jnp.maximum(x, 0.0),
    "gelu": jax.nn.gelu,
}


def cls_head_kernel(feat_ref, w1_ref, b1_ref, w2_ref, b2_ref, out_ref,
                    acc_ref, *, inv_t, t_tile, seq_len, mask_t_tail,
                    activation):
    """Fused mean-pool (streamed over T) -> dense -> act -> out_proj.

    feat_ref: [bT, tT, D]  w1_ref: [D, H]  b1_ref: [1, H]
    w2_ref:   [H, Cp]      b2_ref: [1, Cp] out_ref: [bT, Cp]
    acc_ref:  [bT, D] f32 scratch (running sum over the T axis)
    """
    t = pl.program_id(1)

    @pl.when(t == 0)
    def _init():
        acc_ref[...] = jnp.zeros_like(acc_ref)

    x = feat_ref[...].astype(jnp.float32)  # [bT, tT, D]
    if mask_t_tail:
        # The last (partial) T block extends past the true sequence length;
        # its out-of-range rows hold unspecified VMEM contents and must not
        # contribute to the pooled sum.  (No-op on non-tail steps.)
        row = t * t_tile + jax.lax.broadcasted_iota(jnp.int32, x.shape, 1)
        x = jnp.where(row < seq_len, x, 0.0)

    # Pure adds per tile; the 1/T scale is folded into the finalize step.
    acc_ref[...] += jnp.sum(x, axis=1)

    @pl.when(t == pl.num_programs(1) - 1)
    def _finalize():
        pooled = acc_ref[...] * inv_t                                # [bT, D]
        # TODO(synk): dropout (p=pooler_dropout) is identity in eval mode; a
        # training-mode version would mask with pltpu.prng_random_bits here.
        h = jnp.dot(pooled.astype(w1_ref.dtype), w1_ref[...],
                    preferred_element_type=jnp.float32)
        h = h + b1_ref[...].astype(jnp.float32)
        h = _ACTIVATIONS[activation](h)
        out = jnp.dot(h.astype(w2_ref.dtype), w2_ref[...],
                      preferred_element_type=jnp.float32)
        out = out + b2_ref[...].astype(jnp.float32)
        out_ref[...] = out.astype(out_ref.dtype)


def roberta_cls_no_cls_head(features, w1, b1, w2, b2, *, activation="tanh",
                            b_tile=None, t_tile=None,
                            feat_block_bytes=None, vmem_limit_bytes=None):
    """features: [B, T, D] (f32 or bf16); w1: [D, H]; w2: [H, C] -> [B, C] f32."""
    B, T, D = features.shape
    H = w1.shape[-1]
    C = w2.shape[-1]
    feat_itemsize = jnp.dtype(features.dtype).itemsize
    w_itemsize = jnp.dtype(w1.dtype).itemsize

    # Biases as [1, out] rows (accepts 1-D nn.Linear-style bias too).
    b1 = jnp.asarray(b1).reshape(1, H)
    b2 = jnp.asarray(b2).reshape(1, C)

    # Lane-dense output: pad num_classes to a multiple of 128 (tiny arrays;
    # the extra columns are sliced off below).
    C_pad = _round_up(C, 128)
    w2_p = jnp.pad(w2, ((0, 0), (0, C_pad - C))) if C_pad != C else w2
    b2_p = jnp.pad(b2, ((0, 0), (0, C_pad - C))) if C_pad != C else b2

    # --- VMEM limit per chip generation (v5e/v6e: 128 MiB, v7x: 64 MiB) ---
    if vmem_limit_bytes is None:
        try:
            phys = int(pltpu.get_tpu_info().vmem_capacity_bytes)
        except Exception:
            phys = 64 * 1024 * 1024          # conservative (v7x-sized)
        vmem_limit_bytes = min(100 * 1024 * 1024, (phys * 7) // 8)
    vmem_limit_bytes = int(vmem_limit_bytes)

    # --- batch tiling: cap at 64 sublanes so the parallel B axis has >= 2
    #     grid steps whenever the batch allows it (v7x megacore) ---
    if b_tile is None:
        b_tile = min(_round_up(B, 8), 64)
        if B > 8 and pl.cdiv(B, b_tile) < 2:
            b_tile = _round_up(pl.cdiv(B, 2), 8)

    # --- streamed-block byte budget: vmem_limit covers 2x feature block +
    #     resident (single-buffered) weights + f32 acc + 2x output + slack ---
    if feat_block_bytes is None:
        resident = ((D * H + H + H * C_pad + C_pad) * w_itemsize
                    + b_tile * D * 4                      # accumulator
                    + 2 * b_tile * C_pad * 4)             # output block
        feat_block_bytes = (vmem_limit_bytes - resident - 4 * 1024 * 1024) // 2
        feat_block_bytes = max(1 * 1024 * 1024,
                               min(24 * 1024 * 1024, feat_block_bytes))

    # --- T tiling: largest multiple of 8 whose (b_tile, t_tile, D) block fits
    #     the budget; never larger than the (8-rounded) sequence length ---
    if t_tile is None:
        rows = feat_block_bytes // max(1, b_tile * D * feat_itemsize)
        t_tile = max(8, (rows // 8) * 8)
    t_tile = min(t_tile, _round_up(T, 8))
    mask_t_tail = (T % t_tile) != 0

    grid = (pl.cdiv(B, b_tile), pl.cdiv(T, t_tile))

    kernel = functools.partial(
        cls_head_kernel, inv_t=1.0 / float(T), t_tile=t_tile, seq_len=T,
        mask_t_tail=mask_t_tail, activation=activation)

    def _build(single_buffer_weights):
        if single_buffer_weights:
            # Constant index_map -> fetched once; no need for a double buffer.
            kw = dict(pipeline_mode=pl.Buffered(1))
        else:
            kw = {}

        def resident_spec(shape):
            return pl.BlockSpec(shape, lambda b, t: (0, 0), **kw)

        return pl.pallas_call(
            kernel,
            out_shape=jax.ShapeDtypeStruct((B, C_pad), jnp.float32),
            grid_spec=pltpu.PrefetchScalarGridSpec(
                num_scalar_prefetch=0,
                grid=grid,
                in_specs=[
                    # streamed feature blocks (partial edge blocks allowed;
                    # T tail masked in-kernel, B tail rows never read back)
                    pl.BlockSpec((b_tile, t_tile, D), lambda b, t: (b, t, 0)),
                    # weights / biases: constant block index -> VMEM resident
                    resident_spec((D, H)),
                    resident_spec((1, H)),
                    resident_spec((H, C_pad)),
                    resident_spec((1, C_pad)),
                ],
                # same output block across the T axis -> written once at the end
                out_specs=pl.BlockSpec((b_tile, C_pad), lambda b, t: (b, 0)),
                scratch_shapes=[pltpu.VMEM((b_tile, D), jnp.float32)],
            ),
            compiler_params=pltpu.CompilerParams(
                dimension_semantics=("parallel", "arbitrary"),
                vmem_limit_bytes=vmem_limit_bytes,
            ),
        )

    try:
        out = _build(True)(features, w1, b1, w2_p, b2_p)
    except Exception:
        # Fallback if this JAX build rejects single-buffered BlockSpecs.
        out = _build(False)(features, w1, b1, w2_p, b2_p)

    return out[:, :C]


def _reference(features, w1, b1, w2, b2):
    pooled = features.mean(axis=1)
    return jnp.tanh(pooled @ w1 + b1.reshape(1, -1)) @ w2 + b2.reshape(1, -1)


if __name__ == "__main__":
    # Small shapes consistent with the module's forward:
    #   input_dim = 32, inner_dim = 32, num_classes = 4, batch = 2, seq = 8
    B, T, D, H, C = 2, 8, 32, 32, 4

    key = jax.random.PRNGKey(0)
    k_feat, k_w1, k_b1, k_w2, k_b2 = jax.random.split(key, 5)

    features = jax.random.normal(k_feat, (B, T, D), dtype=jnp.float32)

    # Synthetic params.  nn.Linear stores weight as [out, in]; we keep the
    # transposed [in, out] layout (conversion happens exactly once, here).
    w1 = jax.random.normal(k_w1, (D, H), dtype=jnp.float32) * (1.0 / jnp.sqrt(D))
    b1 = jax.random.normal(k_b1, (1, H), dtype=jnp.float32) * 0.02
    w2 = jax.random.normal(k_w2, (H, C), dtype=jnp.float32) * (1.0 / jnp.sqrt(H))
    b2 = jax.random.normal(k_b2, (1, C), dtype=jnp.float32) * 0.02

    out = roberta_cls_no_cls_head(features, w1, b1, w2, b2)
    out = jax.block_until_ready(out)
    ref = _reference(features, w1, b1, w2, b2)
    assert out.shape == (B, C)
    assert jnp.allclose(out, ref, atol=1e-5, rtol=1e-5), "mismatch vs reference"

    # Second check: batch / seq NOT multiples of the tile sizes, exercising
    # the un-padded partial edge blocks and the in-kernel T-tail mask.
    B2, T2 = 3, 10
    feat2 = jax.random.normal(jax.random.PRNGKey(1), (B2, T2, D), jnp.float32)
    out2 = jax.block_until_ready(roberta_cls_no_cls_head(feat2, w1, b1, w2, b2))
    ref2 = _reference(feat2, w1, b1, w2, b2)
    assert out2.shape == (B2, C)
    assert jnp.allclose(out2, ref2, atol=1e-5, rtol=1e-5), "tail-mask mismatch"

    print("KERNEL_OK")
</pallas_src>

<mosaic_0001>
module attributes {stable_mosaic.version = 11 : i64} {
  func.func @cls_head_kernel(%arg0: i32, %arg1: i32, %arg2: memref<8x8x32xf32, #tpu.memory_space<vmem>>, %arg3: memref<32x32xf32, #tpu.memory_space<vmem>>, %arg4: memref<1x32xf32, #tpu.memory_space<vmem>>, %arg5: memref<32x128xf32, #tpu.memory_space<vmem>>, %arg6: memref<1x128xf32, #tpu.memory_space<vmem>>, %arg7: memref<8x128xf32, #tpu.memory_space<vmem>>, %arg8: memref<8x32xf32, #tpu.memory_space<vmem>>) attributes {dimension_semantics = [#tpu.dimension_semantics<parallel>, #tpu.dimension_semantics<arbitrary>], iteration_bounds = array<i64: 1, 1>, scalar_prefetch = 0 : i64, scratch_operands = 1 : i64, tpu.core_type = #tpu.core_type<tc>, window_params = [{transform_indices = @transform_0, window_bounds = array<i64: 8, 8, 32>}, {pipeline_mode = #tpu.pipeline_mode<synchronous>, transform_indices = @transform_1, window_bounds = array<i64: 32, 32>}, {pipeline_mode = #tpu.pipeline_mode<synchronous>, transform_indices = @transform_2, window_bounds = array<i64: 1, 32>}, {pipeline_mode = #tpu.pipeline_mode<synchronous>, transform_indices = @transform_3, window_bounds = array<i64: 32, 128>}, {pipeline_mode = #tpu.pipeline_mode<synchronous>, transform_indices = @transform_4, window_bounds = array<i64: 1, 128>}, {transform_indices = @transform_5, window_bounds = array<i64: 8, 128>}]} {
    %c0_i32 = arith.constant 0 : i32
    %0 = arith.cmpi eq, %arg1, %c0_i32 : i32
    %1 = arith.extui %0 : i1 to i32
    %c0_i32_0 = arith.constant 0 : i32
    %2 = arith.cmpi ne, %1, %c0_i32_0 : i32
    scf.if %2 {
      %cst_9 = arith.constant 0.000000e+00 : f32
      %11 = vector.broadcast %cst_9 : f32 to vector<8x32xf32>
      %c0_10 = arith.constant 0 : index
      %c0_11 = arith.constant 0 : index
      %12 = vector.load %arg8[%c0_10, %c0_11] : memref<8x32xf32, #tpu.memory_space<vmem>>, vector<8x32xf32>
      tpu.vector_store %arg8[%c0_10, %c0_11], %11 {strides = array<i32>} : memref<8x32xf32, #tpu.memory_space<vmem>>, vector<8x32xf32>,
    } else {
    }
    %c0 = arith.constant 0 : index
    %c0_1 = arith.constant 0 : index
    %c0_2 = arith.constant 0 : index
    %3 = vector.load %arg2[%c0, %c0_1, %c0_2] : memref<8x8x32xf32, #tpu.memory_space<vmem>>, vector<8x8x32xf32>
    %c0_3 = arith.constant 0 : index
    %c0_4 = arith.constant 0 : index
    %4 = vector.load %arg8[%c0_3, %c0_4] : memref<8x32xf32, #tpu.memory_space<vmem>>, vector<8x32xf32>
    %cst = arith.constant dense<0.000000e+00> : vector<8x32xf32>
    %5 = vector.multi_reduction <add>, %3, %cst [1] : vector<8x8x32xf32> to vector<8x32xf32>
    %6 = arith.addf %4, %5 : vector<8x32xf32>
    %c0_5 = arith.constant 0 : index
    %c0_6 = arith.constant 0 : index
    %7 = vector.load %arg8[%c0_5, %c0_6] : memref<8x32xf32, #tpu.memory_space<vmem>>, vector<8x32xf32>
    tpu.vector_store %arg8[%c0_5, %c0_6], %6 {strides = array<i32>} : memref<8x32xf32, #tpu.memory_space<vmem>>, vector<8x32xf32>,
    %c0_i32_7 = arith.constant 0 : i32
    %8 = arith.cmpi eq, %arg1, %c0_i32_7 : i32
    %9 = arith.extui %8 : i1 to i32
    %c0_i32_8 = arith.constant 0 : i32
    %10 = arith.cmpi ne, %9, %c0_i32_8 : i32
    scf.if %10 {
      %c0_9 = arith.constant 0 : index
      %c0_10 = arith.constant 0 : index
      %11 = vector.load %arg8[%c0_9, %c0_10] : memref<8x32xf32, #tpu.memory_space<vmem>>, vector<8x32xf32>
      %cst_11 = arith.constant 1.250000e-01 : f32
      %12 = vector.broadcast %cst_11 : f32 to vector<8x32xf32>
      %13 = arith.mulf %11, %12 : vector<8x32xf32>
      %c0_12 = arith.constant 0 : index
      %c0_13 = arith.constant 0 : index
      %14 = vector.load %arg3[%c0_12, %c0_13] : memref<32x32xf32, #tpu.memory_space<vmem>>, vector<32x32xf32>
      %cst_14 = arith.constant dense<0.000000e+00> : vector<8x32xf32>
      %15 = tpu.matmul %13, %14, %cst_14 {dimension_numbers = #tpu.dot_dimension_numbers<[1], [0], [0], [1], [0, 0, 1, 1], [], []>} : vector<8x32xf32>, vector<32x32xf32>, vector<8x32xf32> -> vector<8x32xf32>
      %c0_15 = arith.constant 0 : index
      %c0_16 = arith.constant 0 : index
      %16 = vector.load %arg4[%c0_15, %c0_16] : memref<1x32xf32, #tpu.memory_space<vmem>>, vector<1x32xf32>
      %17 = vector.broadcast %16 : vector<1x32xf32> to vector<8x32xf32>
      %18 = arith.addf %15, %17 : vector<8x32xf32>
      %19 = math.tanh %18 : vector<8x32xf32>
      %c0_17 = arith.constant 0 : index
      %c0_18 = arith.constant 0 : index
      %20 = vector.load %arg5[%c0_17, %c0_18] : memref<32x128xf32, #tpu.memory_space<vmem>>, vector<32x128xf32>
      %cst_19 = arith.constant dense<0.000000e+00> : vector<8x128xf32>
      %21 = tpu.matmul %19, %20, %cst_19 {dimension_numbers = #tpu.dot_dimension_numbers<[1], [0], [0], [1], [0, 0, 1, 1], [], []>} : vector<8x32xf32>, vector<32x128xf32>, vector<8x128xf32> -> vector<8x128xf32>
      %c0_20 = arith.constant 0 : index
      %c0_21 = arith.constant 0 : index
      %22 = vector.load %arg6[%c0_20, %c0_21] : memref<1x128xf32, #tpu.memory_space<vmem>>, vector<1x128xf32>
      %23 = vector.broadcast %22 : vector<1x128xf32> to vector<8x128xf32>
      %24 = arith.addf %21, %23 : vector<8x128xf32>
      %c0_22 = arith.constant 0 : index
      %c0_23 = arith.constant 0 : index
      %25 = vector.load %arg7[%c0_22, %c0_23] : memref<8x128xf32, #tpu.memory_space<vmem>>, vector<8x128xf32>
      tpu.vector_store %arg7[%c0_22, %c0_23], %24 {strides = array<i32>} : memref<8x128xf32, #tpu.memory_space<vmem>>, vector<8x128xf32>,
    } else {
    }
    return
  }
  func.func @transform_0(%arg0: i32, %arg1: i32) -> (i32, i32, i32) {
    %c0_i32 = arith.constant 0 : i32
    %c0_i32_0 = arith.constant 0 : i32
    return %arg0, %arg1, %c0_i32 : i32, i32, i32
  }
  func.func @transform_1(%arg0: i32, %arg1: i32) -> (i32, i32) {
    %c0_i32 = arith.constant 0 : i32
    %c0_i32_0 = arith.constant 0 : i32
    %c0_i32_1 = arith.constant 0 : i32
    return %c0_i32, %c0_i32_0 : i32, i32
  }
  func.func @transform_2(%arg0: i32, %arg1: i32) -> (i32, i32) {
    %c0_i32 = arith.constant 0 : i32
    %c0_i32_0 = arith.constant 0 : i32
    %c0_i32_1 = arith.constant 0 : i32
    return %c0_i32, %c0_i32_0 : i32, i32
  }
  func.func @transform_3(%arg0: i32, %arg1: i32) -> (i32, i32) {
    %c0_i32 = arith.constant 0 : i32
    %c0_i32_0 = arith.constant 0 : i32
    %c0_i32_1 = arith.constant 0 : i32
    return %c0_i32, %c0_i32_0 : i32, i32
  }
  func.func @transform_4(%arg0: i32, %arg1: i32) -> (i32, i32) {
    %c0_i32 = arith.constant 0 : i32
    %c0_i32_0 = arith.constant 0 : i32
    %c0_i32_1 = arith.constant 0 : i32
    return %c0_i32, %c0_i32_0 : i32, i32
  }
  func.func @transform_5(%arg0: i32, %arg1: i32) -> (i32, i32) {
    %c0_i32 = arith.constant 0 : i32
    %c0_i32_0 = arith.constant 0 : i32
    return %arg0, %c0_i32 : i32, i32
  }
}

module attributes {stable_mosaic.version = 11 : i64} {
  func.func @cls_head_kernel(%arg0: i32, %arg1: i32, %arg2: memref<8x8x32xf32, #tpu.memory_space<vmem>>, %arg3: memref<32x32xf32, #tpu.memory_space<vmem>>, %arg4: memref<1x32xf32, #tpu.memory_space<vmem>>, %arg5: memref<32x128xf32, #tpu.memory_space<vmem>>, %arg6: memref<1x128xf32, #tpu.memory_space<vmem>>, %arg7: memref<8x128xf32, #tpu.memory_space<vmem>>, %arg8: memref<8x32xf32, #tpu.memory_space<vmem>>) attributes {dimension_semantics = [#tpu.dimension_semantics<parallel>, #tpu.dimension_semantics<arbitrary>], iteration_bounds = array<i64: 1, 1>, scalar_prefetch = 0 : i64, scratch_operands = 1 : i64, tpu.core_type = #tpu.core_type<tc>, window_params = [{transform_indices = @transform_0, window_bounds = array<i64: 8, 8, 32>}, {pipeline_mode = #tpu.pipeline_mode<synchronous>, transform_indices = @transform_1, window_bounds = array<i64: 32, 32>}, {pipeline_mode = #tpu.pipeline_mode<synchronous>, transform_indices = @transform_2, window_bounds = array<i64: 1, 32>}, {pipeline_mode = #tpu.pipeline_mode<synchronous>, transform_indices = @transform_3, window_bounds = array<i64: 32, 128>}, {pipeline_mode = #tpu.pipeline_mode<synchronous>, transform_indices = @transform_4, window_bounds = array<i64: 1, 128>}, {transform_indices = @transform_5, window_bounds = array<i64: 8, 128>}]} {
    %c0_i32 = arith.constant 0 : i32
    %0 = arith.cmpi eq, %arg1, %c0_i32 : i32
    %1 = arith.extui %0 : i1 to i32
    %c0_i32_0 = arith.constant 0 : i32
    %2 = arith.cmpi ne, %1, %c0_i32_0 : i32
    scf.if %2 {
      %cst_9 = arith.constant 0.000000e+00 : f32
      %11 = vector.broadcast %cst_9 : f32 to vector<8x32xf32>
      %c0_10 = arith.constant 0 : index
      %c0_11 = arith.constant 0 : index
      %12 = vector.load %arg8[%c0_10, %c0_11] : memref<8x32xf32, #tpu.memory_space<vmem>>, vector<8x32xf32>
      tpu.vector_store %arg8[%c0_10, %c0_11], %11 {strides = array<i32>} : memref<8x32xf32, #tpu.memory_space<vmem>>, vector<8x32xf32>,
    } else {
    }
    %c0 = arith.constant 0 : index
    %c0_1 = arith.constant 0 : index
    %c0_2 = arith.constant 0 : index
    %3 = vector.load %arg2[%c0, %c0_1, %c0_2] : memref<8x8x32xf32, #tpu.memory_space<vmem>>, vector<8x8x32xf32>
    %c0_3 = arith.constant 0 : index
    %c0_4 = arith.constant 0 : index
    %4 = vector.load %arg8[%c0_3, %c0_4] : memref<8x32xf32, #tpu.memory_space<vmem>>, vector<8x32xf32>
    %cst = arith.constant dense<0.000000e+00> : vector<8x32xf32>
    %5 = vector.multi_reduction <add>, %3, %cst [1] : vector<8x8x32xf32> to vector<8x32xf32>
    %6 = arith.addf %4, %5 : vector<8x32xf32>
    %c0_5 = arith.constant 0 : index
    %c0_6 = arith.constant 0 : index
    %7 = vector.load %arg8[%c0_5, %c0_6] : memref<8x32xf32, #tpu.memory_space<vmem>>, vector<8x32xf32>
    tpu.vector_store %arg8[%c0_5, %c0_6], %6 {strides = array<i32>} : memref<8x32xf32, #tpu.memory_space<vmem>>, vector<8x32xf32>,
    %c0_i32_7 = arith.constant 0 : i32
    %8 = arith.cmpi eq, %arg1, %c0_i32_7 : i32
    %9 = arith.extui %8 : i1 to i32
    %c0_i32_8 = arith.constant 0 : i32
    %10 = arith.cmpi ne, %9, %c0_i32_8 : i32
    scf.if %10 {
      %c0_9 = arith.constant 0 : index
      %c0_10 = arith.constant 0 : index
      %11 = vector.load %arg8[%c0_9, %c0_10] : memref<8x32xf32, #tpu.memory_space<vmem>>, vector<8x32xf32>
      %cst_11 = arith.constant 1.250000e-01 : f32
      %12 = vector.broadcast %cst_11 : f32 to vector<8x32xf32>
      %13 = arith.mulf %11, %12 : vector<8x32xf32>
      %c0_12 = arith.constant 0 : index
      %c0_13 = arith.constant 0 : index
      %14 = vector.load %arg3[%c0_12, %c0_13] : memref<32x32xf32, #tpu.memory_space<vmem>>, vector<32x32xf32>
      %cst_14 = arith.constant dense<0.000000e+00> : vector<8x32xf32>
      %15 = tpu.matmul %13, %14, %cst_14 {dimension_numbers = #tpu.dot_dimension_numbers<[1], [0], [0], [1], [0, 0, 1, 1], [], []>} : vector<8x32xf32>, vector<32x32xf32>, vector<8x32xf32> -> vector<8x32xf32>
      %c0_15 = arith.constant 0 : index
      %c0_16 = arith.constant 0 : index
      %16 = vector.load %arg4[%c0_15, %c0_16] : memref<1x32xf32, #tpu.memory_space<vmem>>, vector<1x32xf32>
      %17 = vector.broadcast %16 : vector<1x32xf32> to vector<8x32xf32>
      %18 = arith.addf %15, %17 : vector<8x32xf32>
      %19 = math.tanh %18 : vector<8x32xf32>
      %c0_17 = arith.constant 0 : index
      %c0_18 = arith.constant 0 : index
      %20 = vector.load %arg5[%c0_17, %c0_18] : memref<32x128xf32, #tpu.memory_space<vmem>>, vector<32x128xf32>
      %cst_19 = arith.constant dense<0.000000e+00> : vector<8x128xf32>
      %21 = tpu.matmul %19, %20, %cst_19 {dimension_numbers = #tpu.dot_dimension_numbers<[1], [0], [0], [1], [0, 0, 1, 1], [], []>} : vector<8x32xf32>, vector<32x128xf32>, vector<8x128xf32> -> vector<8x128xf32>
      %c0_20 = arith.constant 0 : index
      %c0_21 = arith.constant 0 : index
      %22 = vector.load %arg6[%c0_20, %c0_21] : memref<1x128xf32, #tpu.memory_space<vmem>>, vector<1x128xf32>
      %23 = vector.broadcast %22 : vector<1x128xf32> to vector<8x128xf32>
      %24 = arith.addf %21, %23 : vector<8x128xf32>
      %c0_22 = arith.constant 0 : index
      %c0_23 = arith.constant 0 : index
      %25 = vector.load %arg7[%c0_22, %c0_23] : memref<8x128xf32, #tpu.memory_space<vmem>>, vector<8x128xf32>
      tpu.vector_store %arg7[%c0_22, %c0_23], %24 {strides = array<i32>} : memref<8x128xf32, #tpu.memory_space<vmem>>, vector<8x128xf32>,
    } else {
    }
    return
  }
  func.func @transform_0(%arg0: i32, %arg1: i32) -> (i32, i32, i32) {
    %c0_i32 = arith.constant 0 : i32
    %c0_i32_0 = arith.constant 0 : i32
    return %arg0, %arg1, %c0_i32 : i32, i32, i32
  }
  func.func @transform_1(%arg0: i32, %arg1: i32) -> (i32, i32) {
    %c0_i32 = arith.constant 0 : i32
    %c0_i32_0 = arith.constant 0 : i32
    %c0_i32_1 = arith.constant 0 : i32
    return %c0_i32, %c0_i32_0 : i32, i32
  }
  func.func @transform_2(%arg0: i32, %arg1: i32) -> (i32, i32) {
    %c0_i32 = arith.constant 0 : i32
    %c0_i32_0 = arith.constant 0 : i32
    %c0_i32_1 = arith.constant 0 : i32
    return %c0_i32, %c0_i32_0 : i32, i32
  }
  func.func @transform_3(%arg0: i32, %arg1: i32) -> (i32, i32) {
    %c0_i32 = arith.constant 0 : i32
    %c0_i32_0 = arith.constant 0 : i32
    %c0_i32_1 = arith.constant 0 : i32
    return %c0_i32, %c0_i32_0 : i32, i32
  }
  func.func @transform_4(%arg0: i32, %arg1: i32) -> (i32, i32) {
    %c0_i32 = arith.constant 0 : i32
    %c0_i32_0 = arith.constant 0 : i32
    %c0_i32_1 = arith.constant 0 : i32
    return %c0_i32, %c0_i32_0 : i32, i32
  }
  func.func @transform_5(%arg0: i32, %arg1: i32) -> (i32, i32) {
    %c0_i32 = arith.constant 0 : i32
    %c0_i32_0 = arith.constant 0 : i32
    return %arg0, %c0_i32 : i32, i32
  }
}

</mosaic_0001>

<llo_original>
// kernel: tpu_custom_call.1
$region0: #{tpu_custom_call.1}
  #allocation0 [shape = 'u32[]', space=smem, size = 0x4, offset = 0x4, fixed_abs, tag = 'smem constant byte address 0x4 - core index']
  #allocation1 [shape = 'u32[144,128]{1,0:T(1,128)}', space=vmem, size = 0x12000, scoped, tag = 'internal scratch']
  #allocation2 [shape = 'f32[8,32]{1,0:T(8,128)}', space=vmem, size = 0x1000, scoped, tag = 'scratch operand']
  %s0 = inlined_call_operand.hbm [shape: f32[2,8,32], index: 0, kind: input, shape index: {}]
  %s1 = inlined_call_operand.hbm [shape: f32[32,32], index: 1, kind: input, shape index: {}]
  %s2 = inlined_call_operand.vmem [shape: f32[1,32], index: 2, kind: input, shape index: {}]
  %s3 = inlined_call_operand.hbm [shape: f32[32,128], index: 3, kind: input, shape index: {}]
  %s4 = inlined_call_operand.vmem [shape: f32[1,128], index: 4, kind: input, shape index: {}]
  %s5 = inlined_call_operand.hbm [shape: f32[2,128], index: 5, kind: output, shape index: {}]
  %s6 = sld [smem:[#allocation0]]
  $region50: #{tpu_custom_call.1} parent=0
    _
  %s8 = ssub.s32 1, %s6
  %s9 = scalar_select 0, %s8, %s6
  $region1: #{tpu_custom_call.1} parent=0
    #allocation3 [shape = 'u8[32768]{0}', space=vmem, size = 0x8000, scoped, tag = 'input window, operand 0, single buffered']
    #allocation4 [shape = 's32[1]{0}', space=sflag, size = 0x4, scoped, tag = 'scoped memory for tpu_custom_call.1']
    #allocation5 [shape = 's32[1]{0}', space=sflag, size = 0x4, scoped, tag = 'scoped memory for tpu_custom_call.1']
    #allocation6 [shape = 'u8[16384]{0}', space=vmem, size = 0x4000, scoped, tag = 'input window, operand 1, single buffered']
    #allocation7 [shape = 's32[1]{0}', space=sflag, size = 0x4, scoped, tag = 'scoped memory for tpu_custom_call.1']
    #allocation8 [shape = 'u8[16384]{0}', space=vmem, size = 0x4000, scoped, tag = 'input window, operand 3, single buffered']
    #allocation9 [shape = 'u8[4096]{0}', space=vmem, size = 0x1000, scoped, tag = 'output window, operand 0, single buffered']
    %10 = vsyncpa [#allocation4], 0
    %11 = vsyncpa [#allocation7], 0
    %12 = vsyncpa [#allocation5], 0
    // Predicated region
    $region2: #{tpu_custom_call.1} parent=1 // pred_check
      _
    $region3: #{tpu_custom_call.1} parent=1 // pred_check_branch
      %14 = sbr.rel (0) target = $region5
    $region4: #{tpu_custom_call.1} parent=1 // pred_region
      %s16 = ssub.s32 1024, 256
      %17 = vsyncadd [#allocation4], %s16
      %s18 = sshll.u32 [#allocation3], 4
      %s19 = int_to_ptr.vmem [resolvable:$true] %s18
      %24 = dma.hbm_to_vmem [thread:$0]  %s0, 256, %s19, [#allocation4], 128, 128, 8
    $region5: #{tpu_custom_call.1} parent=1 // pred_fallthru
      _
    // Predicated region
    $region6: #{tpu_custom_call.1} parent=1 // pred_check
      _
    $region7: #{tpu_custom_call.1} parent=1 // pred_check_branch
      %26 = sbr.rel (0) target = $region9
    $region8: #{tpu_custom_call.1} parent=1 // pred_region
      %s28 = ssub.s32 512, 512
      %29 = vsyncadd [#allocation7], %s28
      %s30 = sshll.u32 [#allocation6], 4
      %s31 = int_to_ptr.vmem [resolvable:$true] %s30
      %36 = dma.hbm_to_vmem [thread:$0]  %s1, 512, %s31, [#allocation7], 128, 128, 8
    $region9: #{tpu_custom_call.1} parent=1 // pred_fallthru
      _
    // Predicated region
    $region10: #{tpu_custom_call.1} parent=1 // pred_check
      _
    $region11: #{tpu_custom_call.1} parent=1 // pred_check_branch
      %38 = sbr.rel (0) target = $region13
    $region12: #{tpu_custom_call.1} parent=1 // pred_region
      _
    $region13: #{tpu_custom_call.1} parent=1 // pred_fallthru
      _
    // Predicated region
    $region14: #{tpu_custom_call.1} parent=1 // pred_check
      _
    $region15: #{tpu_custom_call.1} parent=1 // pred_check_branch
      %40 = sbr.rel (0) target = $region17
    $region16: #{tpu_custom_call.1} parent=1 // pred_region
      %s42 = ssub.s32 512, 512
      %43 = vsyncadd [#allocation7], %s42
      %s44 = sshll.u32 [#allocation8], 4
      %s45 = int_to_ptr.vmem [resolvable:$true] %s44
      %50 = dma.hbm_to_vmem [thread:$0]  %s3, 512, %s45, [#allocation7], 128, 128, 8
    $region17: #{tpu_custom_call.1} parent=1 // pred_fallthru
      _
    // Predicated region
    $region18: #{tpu_custom_call.1} parent=1 // pred_check
      _
    $region19: #{tpu_custom_call.1} parent=1 // pred_check_branch
      %52 = sbr.rel (0) target = $region21
    $region20: #{tpu_custom_call.1} parent=1 // pred_region
      _
    $region21: #{tpu_custom_call.1} parent=1 // pred_fallthru
      _
    // Predicated region
    $region22: #{tpu_custom_call.1} parent=1 // pred_check
      _
    $region23: #{tpu_custom_call.1} parent=1 // pred_check_branch
      %54 = sbr.rel (0) target = $region25
    $region24: #{tpu_custom_call.1} parent=1 // pred_region
      %55 = dma.done [#allocation4], 1024
    $region25: #{tpu_custom_call.1} parent=1 // pred_fallthru
      _
    // Predicated region
    $region26: #{tpu_custom_call.1} parent=1 // pred_check
      _
    $region27: #{tpu_custom_call.1} parent=1 // pred_check_branch
      %57 = sbr.rel (0) target = $region29
    $region28: #{tpu_custom_call.1} parent=1 // pred_region
      %58 = dma.done [#allocation7], 512
    $region29: #{tpu_custom_call.1} parent=1 // pred_fallthru
      _
    // Predicated region
    $region30: #{tpu_custom_call.1} parent=1 // pred_check
      _
    $region31: #{tpu_custom_call.1} parent=1 // pred_check_branch
      %60 = sbr.rel (0) target = $region33
    $region32: #{tpu_custom_call.1} parent=1 // pred_region
      %61 = dma.done [#allocation7], 512
    $region33: #{tpu_custom_call.1} parent=1 // pred_fallthru
      _
    %p62 = scmp.eq.s32.totalorder 0, 0
    // Predicated region
    $region34: #{tpu_custom_call.1} parent=1 // pred_check
      %p63 = pneg %p62
    $region35: #{tpu_custom_call.1} parent=1 // pred_check_branch
      %65 = sbr.rel (%p63) target = $region37
    $region36: #{tpu_custom_call.1} parent=1 // pred_region
      %vm66 = vcmask 261120
      %67 = vst.msk [vmem:[#allocation2] sm:$0xff] %vm66, 0.0
    $region37: #{tpu_custom_call.1} parent=1 // pred_fallthru
      _
    %v68 = vld [vmem:[#allocation3] sm:$0xff]
    %v69 = vld [vmem:[#allocation3 + $0x8] sm:$0xff]
    %v70 = vld [vmem:[#allocation3 + $0x10] sm:$0xff]
    %v71 = vld [vmem:[#allocation3 + $0x18] sm:$0xff]
    %v72 = vld [vmem:[#allocation3 + $0x20] sm:$0xff]
    %v73 = vld [vmem:[#allocation3 + $0x28] sm:$0xff]
    %v74 = vld [vmem:[#allocation3 + $0x30] sm:$0xff]
    %v75 = vld [vmem:[#allocation3 + $0x38] sm:$0xff]
    %v76 = vld [vmem:[#allocation2] sm:$0xff]
    %vm77 = vcmask 261120
    %v78 = vsel %vm77, %v68, 0.0
    %v79 = vrot.slane %v78, 4
    %v80 = vadd.f32 %v78, %v79
    %v81 = vrot.slane %v80, 2
    %v82 = vadd.f32 %v80, %v81
    %v83 = vrot.slane %v82, 1
    %v84 = vadd.f32 %v82, %v83
    %v85 = vsel %vm77, %v69, 0.0
    %v86 = vrot.slane %v85, 4
    %v87 = vadd.f32 %v85, %v86
    %v88 = vrot.slane %v87, 2
    %v89 = vadd.f32 %v87, %v88
    %v90 = vrot.slane %v89, 1
    %v91 = vadd.f32 %v89, %v90
    %v92 = vsel %vm77, %v70, 0.0
    %v93 = vrot.slane %v92, 4
    %v94 = vadd.f32 %v92, %v93
    %v95 = vrot.slane %v94, 2
    %v96 = vadd.f32 %v94, %v95
    %v97 = vrot.slane %v96, 1
    %v98 = vadd.f32 %v96, %v97
    %v99 = vsel %vm77, %v71, 0.0
    %v100 = vrot.slane %v99, 4
    %v101 = vadd.f32 %v99, %v100
    %v102 = vrot.slane %v101, 2
    %v103 = vadd.f32 %v101, %v102
    %v104 = vrot.slane %v103, 1
    %v105 = vadd.f32 %v103, %v104
    %v106 = vsel %vm77, %v72, 0.0
    %v107 = vrot.slane %v106, 4
    %v108 = vadd.f32 %v106, %v107
    %v109 = vrot.slane %v108, 2
    %v110 = vadd.f32 %v108, %v109
    %v111 = vrot.slane %v110, 1
    %v112 = vadd.f32 %v110, %v111
    %v113 = vsel %vm77, %v73, 0.0
    %v114 = vrot.slane %v113, 4
    %v115 = vadd.f32 %v113, %v114
    %v116 = vrot.slane %v115, 2
    %v117 = vadd.f32 %v115, %v116
    %v118 = vrot.slane %v117, 1
    %v119 = vadd.f32 %v117, %v118
    %v120 = vsel %vm77, %v74, 0.0
    %v121 = vrot.slane %v120, 4
    %v122 = vadd.f32 %v120, %v121
    %v123 = vrot.slane %v122, 2
    %v124 = vadd.f32 %v122, %v123
    %v125 = vrot.slane %v124, 1
    %v126 = vadd.f32 %v124, %v125
    %v127 = vsel %vm77, %v75, 0.0
    %v128 = vrot.slane %v127, 4
    %v129 = vadd.f32 %v127, %v128
    %v130 = vrot.slane %v129, 2
    %v131 = vadd.f32 %v129, %v130
    %v132 = vrot.slane %v131, 1
    %v133 = vadd.f32 %v131, %v132
    %vm142 = vcmask 1041409
    %v143 = vsel %vm142, %v91, %v84
    %vm144 = vcmask 1042434
    %v145 = vsel %vm144, %v98, %v143
    %vm146 = vcmask 1043459
    %v147 = vsel %vm146, %v105, %v145
    %vm148 = vcmask 1044484
    %v149 = vsel %vm148, %v112, %v147
    %vm150 = vcmask 1045509
    %v151 = vsel %vm150, %v119, %v149
    %vm152 = vcmask 1046534
    %v153 = vsel %vm152, %v126, %v151
    %vm154 = vcmask 1047559
    %v155 = vsel %vm154, %v133, %v153
    %v157 = vadd.f32 %v76, %v155
    %158 = vst.msk [vmem:[#allocation2] sm:$0xff] %vm77, %v157
    // Predicated region
    $region38: #{tpu_custom_call.1} parent=1 // pred_check
      %p159 = pneg %p62
    $region39: #{tpu_custom_call.1} parent=1 // pred_check_branch
      %161 = sbr.rel (%p159) target = $region41
    $region40: #{tpu_custom_call.1} parent=1 // pred_region
      %v162 = vld [vmem:[#allocation2] sm:$0xff]
      %v163 = vmul.f32 %v162, 0.125
      %v164 = vld [vmem:[#allocation6] sm:$0xff]
      %v165 = vld [vmem:[#allocation6 + $0x8] sm:$0xff]
      %v166 = vld [vmem:[#allocation6 + $0x10] sm:$0xff]
      %v167 = vld [vmem:[#allocation6 + $0x18] sm:$0xff]
      %v168 = vld [vmem:[%s2] sm:$0x1]
      %v170 = vlaneseq
      %v171 = vshrl.u32 %v170, 7
      %v172 = vsub.s32 0, %v171
      %v173 = vrot.slane %v168, %v172
      %v176 = vsel %vm77, %v163, 0
      %178 = vmatprep.subr.mxu0 0.0
      %179 = vmatpush1.msra.mxu0 %v164
      %180 = vmatprep.subr.mxu0 0.0
      %181 = vmatpush1.msra.mxu0 %v165
      %182 = vmatprep.subr.mxu0 0.0
      %183 = vmatpush1.msra.mxu0 %v166
      %184 = vmatprep.subr.mxu0 0.0
      %185 = vmatpush1.msra.mxu0 %v167
      %186 = vmatprep.subr.mxu0 0.0
      %187 = vmatpush1.msra.mxu0 0.0
      %188 = vmatprep.subr.mxu0 0.0
      %189 = vmatpush1.msra.mxu0 0.0
      %190 = vmatprep.subr.mxu0 0.0
      %191 = vmatpush1.msra.mxu0 0.0
      %192 = vmatprep.subr.mxu0 0.0
      %193 = vmatpush1.msra.mxu0 0.0
      %194 = vmatprep.subr.mxu0 0.0
      %195 = vmatpush1.msra.mxu0 0.0
      %196 = vmatprep.subr.mxu0 0.0
      %197 = vmatpush1.msra.mxu0 0.0
      %198 = vmatprep.subr.mxu0 0.0
      %199 = vmatpush1.msra.mxu0 0.0
      %200 = vmatprep.subr.mxu0 0.0
      %201 = vmatpush1.msra.mxu0 0.0
      %202 = vmatprep.subr.mxu0 0.0
      %203 = vmatpush1.msra.mxu0 0.0
      %204 = vmatprep.subr.mxu0 0.0
      %205 = vmatpush1.msra.mxu0 0.0
      %206 = vmatprep.subr.mxu0 0.0
      %207 = vmatpush1.msra.mxu0 0.0
      %208 = vmatprep.subr.mxu0 0.0
      %209 = vmatpush1.msra.mxu0 0.0
      %210 = vmatprep.subr.mxu0 0.0
      %211 = vmatpush1.msra.mxu0 0.0
      %212 = vmatprep.subr.mxu0 0.0
      %213 = vmatpush1.msra.mxu0 0.0
      %214 = vmatprep.subr.mxu0 0.0
      %215 = vmatpush1.msra.mxu0 0.0
      %216 = vmatprep.subr.mxu0 0.0
      %217 = vmatpush1.msra.mxu0 0.0
      %218 = vmatprep.subr.mxu0 0.0
      %219 = vmatpush1.msra.mxu0 0.0
      %220 = vmatprep.subr.mxu0 0.0
      %221 = vmatpush1.msra.mxu0 0.0
      %222 = vmatprep.subr.mxu0 0.0
      %223 = vmatpush1.msra.mxu0 0.0
      %224 = vmatprep.subr.mxu0 0.0
      %225 = vmatpush1.msra.mxu0 0.0
      %226 = vmatprep.subr.mxu0 0.0
      %227 = vmatpush1.msra.mxu0 0.0
      %228 = vmatprep.subr.mxu0 0.0
      %229 = vmatpush1.msra.mxu0 0.0
      %230 = vmatprep.subr.mxu0 0.0
      %231 = vmatpush1.msra.mxu0 0.0
      %232 = vmatprep.subr.mxu0 0.0
      %233 = vmatpush1.msra.mxu0 0.0
      %234 = vmatprep.subr.mxu0 0.0
      %235 = vmatpush1.msra.mxu0 0.0
      %236 = vmatprep.subr.mxu0 0.0
      %237 = vmatpush1.msra.mxu0 0.0
      %238 = vmatprep.subr.mxu0 0.0
      %239 = vmatpush1.msra.mxu0 0.0
      %240 = vmatprep.subr.mxu0 0.0
      %241 = vmatpush1.msra.mxu0 0.0
      %242 = vmatprep.mubr.f32.mxu0 0.0
      %243 = vmatmul.mubr.f32.gmra.mrb[0].mxu0 %v176
      %v244 = vpop.f32.mrb[0].mxu0
      %v245 = vadd.f32 %v173, %v244
      %v246 = vpop.f32.mrb[0].mxu0
      %247 = vdwg.mxu0
      %v248 = vtanh.pop %v245
      %v249 = vld [vmem:[#allocation8] sm:$0xff]
      %v250 = vld [vmem:[#allocation8 + $0x8] sm:$0xff]
      %v251 = vld [vmem:[#allocation8 + $0x10] sm:$0xff]
      %v252 = vld [vmem:[#allocation8 + $0x18] sm:$0xff]
      %v253 = vld [vmem:[%s4] sm:$0x1]
      %v255 = vlaneseq
      %v256 = vshrl.u32 %v255, 7
      %v257 = vsub.s32 0, %v256
      %v258 = vrot.slane %v253, %v257
      %v261 = vsel %vm77, %v248, 0
      %263 = vmatprep.subr.mxu0 0.0
      %264 = vmatpush1.msra.mxu0 %v249
      %265 = vmatprep.subr.mxu0 0.0
      %266 = vmatpush1.msra.mxu0 %v250
      %267 = vmatprep.subr.mxu0 0.0
      %268 = vmatpush1.msra.mxu0 %v251
      %269 = vmatprep.subr.mxu0 0.0
      %270 = vmatpush1.msra.mxu0 %v252
      %271 = vmatprep.subr.mxu0 0.0
      %272 = vmatpush1.msra.mxu0 0.0
      %273 = vmatprep.subr.mxu0 0.0
      %274 = vmatpush1.msra.mxu0 0.0
      %275 = vmatprep.subr.mxu0 0.0
      %276 = vmatpush1.msra.mxu0 0.0
      %277 = vmatprep.subr.mxu0 0.0
      %278 = vmatpush1.msra.mxu0 0.0
      %279 = vmatprep.subr.mxu0 0.0
      %280 = vmatpush1.msra.mxu0 0.0
      %281 = vmatprep.subr.mxu0 0.0
      %282 = vmatpush1.msra.mxu0 0.0
      %283 = vmatprep.subr.mxu0 0.0
      %284 = vmatpush1.msra.mxu0 0.0
      %285 = vmatprep.subr.mxu0 0.0
      %286 = vmatpush1.msra.mxu0 0.0
      %287 = vmatprep.subr.mxu0 0.0
      %288 = vmatpush1.msra.mxu0 0.0
      %289 = vmatprep.subr.mxu0 0.0
      %290 = vmatpush1.msra.mxu0 0.0
      %291 = vmatprep.subr.mxu0 0.0
      %292 = vmatpush1.msra.mxu0 0.0
      %293 = vmatprep.subr.mxu0 0.0
      %294 = vmatpush1.msra.mxu0 0.0
      %295 = vmatprep.subr.mxu0 0.0
      %296 = vmatpush1.msra.mxu0 0.0
      %297 = vmatprep.subr.mxu0 0.0
      %298 = vmatpush1.msra.mxu0 0.0
      %299 = vmatprep.subr.mxu0 0.0
      %300 = vmatpush1.msra.mxu0 0.0
      %301 = vmatprep.subr.mxu0 0.0
      %302 = vmatpush1.msra.mxu0 0.0
      %303 = vmatprep.subr.mxu0 0.0
      %304 = vmatpush1.msra.mxu0 0.0
      %305 = vmatprep.subr.mxu0 0.0
      %306 = vmatpush1.msra.mxu0 0.0
      %307 = vmatprep.subr.mxu0 0.0
      %308 = vmatpush1.msra.mxu0 0.0
      %309 = vmatprep.subr.mxu0 0.0
      %310 = vmatpush1.msra.mxu0 0.0
      %311 = vmatprep.subr.mxu0 0.0
      %312 = vmatpush1.msra.mxu0 0.0
      %313 = vmatprep.subr.mxu0 0.0
      %314 = vmatpush1.msra.mxu0 0.0
      %315 = vmatprep.subr.mxu0 0.0
      %316 = vmatpush1.msra.mxu0 0.0
      %317 = vmatprep.subr.mxu0 0.0
      %318 = vmatpush1.msra.mxu0 0.0
      %319 = vmatprep.subr.mxu0 0.0
      %320 = vmatpush1.msra.mxu0 0.0
      %321 = vmatprep.subr.mxu0 0.0
      %322 = vmatpush1.msra.mxu0 0.0
      %323 = vmatprep.subr.mxu0 0.0
      %324 = vmatpush1.msra.mxu0 0.0
      %325 = vmatprep.subr.mxu0 0.0
      %326 = vmatpush1.msra.mxu0 0.0
      %327 = vmatprep.mubr.f32.mxu0 0.0
      %328 = vmatmul.mubr.f32.gmra.mrb[0].mxu0 %v261
      %v329 = vpop.f32.mrb[0].mxu0
      %v330 = vadd.f32 %v258, %v329
      %v331 = vpop.f32.mrb[0].mxu0
      %332 = vdwg.mxu0
      %333 = vst [vmem:[#allocation9] sm:$0xff] %v330
    $region41: #{tpu_custom_call.1} parent=1 // pred_fallthru
      _
    // Predicated region
    $region42: #{tpu_custom_call.1} parent=1 // pred_check
      _
    $region43: #{tpu_custom_call.1} parent=1 // pred_check_branch
      %335 = sbr.rel (0) target = $region45
    $region44: #{tpu_custom_call.1} parent=1 // pred_region
      %s337 = ssub.s32 128, 32
      %338 = vsyncadd [#allocation5], %s337
      %s339 = sshll.u32 [#allocation9], 4
      %s340 = int_to_ptr.vmem [resolvable:$true] %s339
      %345 = dma.vmem_to_hbm [thread:$0]  %s340, 32, %s5, [#allocation5], 32, 32, 2
    $region45: #{tpu_custom_call.1} parent=1 // pred_fallthru
      _
    // Predicated region
    $region46: #{tpu_custom_call.1} parent=1 // pred_check
      _
    $region47: #{tpu_custom_call.1} parent=1 // pred_check_branch
      %347 = sbr.rel (0) target = $region49
    $region48: #{tpu_custom_call.1} parent=1 // pred_region
      %348 = dma.done [#allocation5], 128
    $region49: #{tpu_custom_call.1} parent=1 // pred_fallthru
      _
    %349 = vsyncpa [#allocation4], 1
    %350 = vsyncpa [#allocation7], 1
    %351 = vsyncpa [#allocation5], 1

// kernel: tpu_custom_call.1
$region0: #{tpu_custom_call.1}
  #allocation0 [shape = 'u32[]', space=smem, size = 0x4, offset = 0x4, fixed_abs, tag = 'smem constant byte address 0x4 - core index']
  #allocation1 [shape = 'u32[144,128]{1,0:T(1,128)}', space=vmem, size = 0x12000, scoped, tag = 'internal scratch']
  #allocation2 [shape = 'f32[8,32]{1,0:T(8,128)}', space=vmem, size = 0x1000, scoped, tag = 'scratch operand']
  %s0 = inlined_call_operand.hbm [shape: f32[2,8,32], index: 0, kind: input, shape index: {}]
  %s1 = inlined_call_operand.hbm [shape: f32[32,32], index: 1, kind: input, shape index: {}]
  %s2 = inlined_call_operand.vmem [shape: f32[1,32], index: 2, kind: input, shape index: {}]
  %s3 = inlined_call_operand.hbm [shape: f32[32,128], index: 3, kind: input, shape index: {}]
  %s4 = inlined_call_operand.vmem [shape: f32[1,128], index: 4, kind: input, shape index: {}]
  %s5 = inlined_call_operand.hbm [shape: f32[2,128], index: 5, kind: output, shape index: {}]
  %s6 = sld [smem:[#allocation0]]
  $region50: #{tpu_custom_call.1} parent=0
    _
  %s8 = ssub.s32 1, %s6
  %s9 = scalar_select 0, %s8, %s6
  $region1: #{tpu_custom_call.1} parent=0
    #allocation3 [shape = 'u8[32768]{0}', space=vmem, size = 0x8000, scoped, tag = 'input window, operand 0, single buffered']
    #allocation4 [shape = 's32[1]{0}', space=sflag, size = 0x4, scoped, tag = 'scoped memory for tpu_custom_call.1']
    #allocation5 [shape = 's32[1]{0}', space=sflag, size = 0x4, scoped, tag = 'scoped memory for tpu_custom_call.1']
    #allocation6 [shape = 'u8[16384]{0}', space=vmem, size = 0x4000, scoped, tag = 'input window, operand 1, single buffered']
    #allocation7 [shape = 's32[1]{0}', space=sflag, size = 0x4, scoped, tag = 'scoped memory for tpu_custom_call.1']
    #allocation8 [shape = 'u8[16384]{0}', space=vmem, size = 0x4000, scoped, tag = 'input window, operand 3, single buffered']
    #allocation9 [shape = 'u8[4096]{0}', space=vmem, size = 0x1000, scoped, tag = 'output window, operand 0, single buffered']
    %10 = vsyncpa [#allocation4], 0
    %11 = vsyncpa [#allocation7], 0
    %12 = vsyncpa [#allocation5], 0
    // Predicated region
    $region2: #{tpu_custom_call.1} parent=1 // pred_check
      _
    $region3: #{tpu_custom_call.1} parent=1 // pred_check_branch
      %14 = sbr.rel (0) target = $region5
    $region4: #{tpu_custom_call.1} parent=1 // pred_region
      %s16 = ssub.s32 1024, 256
      %17 = vsyncadd [#allocation4], %s16
      %s18 = sshll.u32 [#allocation3], 4
      %s19 = int_to_ptr.vmem [resolvable:$true] %s18
      %24 = dma.hbm_to_vmem [thread:$0]  %s0, 256, %s19, [#allocation4], 128, 128, 8
    $region5: #{tpu_custom_call.1} parent=1 // pred_fallthru
      _
    // Predicated region
    $region6: #{tpu_custom_call.1} parent=1 // pred_check
      _
    $region7: #{tpu_custom_call.1} parent=1 // pred_check_branch
      %26 = sbr.rel (0) target = $region9
    $region8: #{tpu_custom_call.1} parent=1 // pred_region
      %s28 = ssub.s32 512, 512
      %29 = vsyncadd [#allocation7], %s28
      %s30 = sshll.u32 [#allocation6], 4
      %s31 = int_to_ptr.vmem [resolvable:$true] %s30
      %36 = dma.hbm_to_vmem [thread:$0]  %s1, 512, %s31, [#allocation7], 128, 128, 8
    $region9: #{tpu_custom_call.1} parent=1 // pred_fallthru
      _
    // Predicated region
    $region10: #{tpu_custom_call.1} parent=1 // pred_check
      _
    $region11: #{tpu_custom_call.1} parent=1 // pred_check_branch
      %38 = sbr.rel (0) target = $region13
    $region12: #{tpu_custom_call.1} parent=1 // pred_region
      _
    $region13: #{tpu_custom_call.1} parent=1 // pred_fallthru
      _
    // Predicated region
    $region14: #{tpu_custom_call.1} parent=1 // pred_check
      _
    $region15: #{tpu_custom_call.1} parent=1 // pred_check_branch
      %40 = sbr.rel (0) target = $region17
    $region16: #{tpu_custom_call.1} parent=1 // pred_region
      %s42 = ssub.s32 512, 512
      %43 = vsyncadd [#allocation7], %s42
      %s44 = sshll.u32 [#allocation8], 4
      %s45 = int_to_ptr.vmem [resolvable:$true] %s44
      %50 = dma.hbm_to_vmem [thread:$0]  %s3, 512, %s45, [#allocation7], 128, 128, 8
    $region17: #{tpu_custom_call.1} parent=1 // pred_fallthru
      _
    // Predicated region
    $region18: #{tpu_custom_call.1} parent=1 // pred_check
      _
    $region19: #{tpu_custom_call.1} parent=1 // pred_check_branch
      %52 = sbr.rel (0) target = $region21
    $region20: #{tpu_custom_call.1} parent=1 // pred_region
      _
    $region21: #{tpu_custom_call.1} parent=1 // pred_fallthru
      _
    // Predicated region
    $region22: #{tpu_custom_call.1} parent=1 // pred_check
      _
    $region23: #{tpu_custom_call.1} parent=1 // pred_check_branch
      %54 = sbr.rel (0) target = $region25
    $region24: #{tpu_custom_call.1} parent=1 // pred_region
      %55 = dma.done [#allocation4], 1024
    $region25: #{tpu_custom_call.1} parent=1 // pred_fallthru
      _
    // Predicated region
    $region26: #{tpu_custom_call.1} parent=1 // pred_check
      _
    $region27: #{tpu_custom_call.1} parent=1 // pred_check_branch
      %57 = sbr.rel (0) target = $region29
    $region28: #{tpu_custom_call.1} parent=1 // pred_region
      %58 = dma.done [#allocation7], 512
    $region29: #{tpu_custom_call.1} parent=1 // pred_fallthru
      _
    // Predicated region
    $region30: #{tpu_custom_call.1} parent=1 // pred_check
      _
    $region31: #{tpu_custom_call.1} parent=1 // pred_check_branch
      %60 = sbr.rel (0) target = $region33
    $region32: #{tpu_custom_call.1} parent=1 // pred_region
      %61 = dma.done [#allocation7], 512
    $region33: #{tpu_custom_call.1} parent=1 // pred_fallthru
      _
    %p62 = scmp.eq.s32.totalorder 0, 0
    // Predicated region
    $region34: #{tpu_custom_call.1} parent=1 // pred_check
      %p63 = pneg %p62
    $region35: #{tpu_custom_call.1} parent=1 // pred_check_branch
      %65 = sbr.rel (%p63) target = $region37
    $region36: #{tpu_custom_call.1} parent=1 // pred_region
      %vm66 = vcmask 261120
      %67 = vst.msk [vmem:[#allocation2] sm:$0xff] %vm66, 0.0
    $region37: #{tpu_custom_call.1} parent=1 // pred_fallthru
      _
    %v68 = vld [vmem:[#allocation3] sm:$0xff]
    %v69 = vld [vmem:[#allocation3 + $0x8] sm:$0xff]
    %v70 = vld [vmem:[#allocation3 + $0x10] sm:$0xff]
    %v71 = vld [vmem:[#allocation3 + $0x18] sm:$0xff]
    %v72 = vld [vmem:[#allocation3 + $0x20] sm:$0xff]
    %v73 = vld [vmem:[#allocation3 + $0x28] sm:$0xff]
    %v74 = vld [vmem:[#allocation3 + $0x30] sm:$0xff]
    %v75 = vld [vmem:[#allocation3 + $0x38] sm:$0xff]
    %v76 = vld [vmem:[#allocation2] sm:$0xff]
    %vm77 = vcmask 261120
    %v78 = vsel %vm77, %v68, 0.0
    %v79 = vrot.slane %v78, 4
    %v80 = vadd.f32 %v78, %v79
    %v81 = vrot.slane %v80, 2
    %v82 = vadd.f32 %v80, %v81
    %v83 = vrot.slane %v82, 1
    %v84 = vadd.f32 %v82, %v83
    %v85 = vsel %vm77, %v69, 0.0
    %v86 = vrot.slane %v85, 4
    %v87 = vadd.f32 %v85, %v86
    %v88 = vrot.slane %v87, 2
    %v89 = vadd.f32 %v87, %v88
    %v90 = vrot.slane %v89, 1
    %v91 = vadd.f32 %v89, %v90
    %v92 = vsel %vm77, %v70, 0.0
    %v93 = vrot.slane %v92, 4
    %v94 = vadd.f32 %v92, %v93
    %v95 = vrot.slane %v94, 2
    %v96 = vadd.f32 %v94, %v95
    %v97 = vrot.slane %v96, 1
    %v98 = vadd.f32 %v96, %v97
    %v99 = vsel %vm77, %v71, 0.0
    %v100 = vrot.slane %v99, 4
    %v101 = vadd.f32 %v99, %v100
    %v102 = vrot.slane %v101, 2
    %v103 = vadd.f32 %v101, %v102
    %v104 = vrot.slane %v103, 1
    %v105 = vadd.f32 %v103, %v104
    %v106 = vsel %vm77, %v72, 0.0
    %v107 = vrot.slane %v106, 4
    %v108 = vadd.f32 %v106, %v107
    %v109 = vrot.slane %v108, 2
    %v110 = vadd.f32 %v108, %v109
    %v111 = vrot.slane %v110, 1
    %v112 = vadd.f32 %v110, %v111
    %v113 = vsel %vm77, %v73, 0.0
    %v114 = vrot.slane %v113, 4
    %v115 = vadd.f32 %v113, %v114
    %v116 = vrot.slane %v115, 2
    %v117 = vadd.f32 %v115, %v116
    %v118 = vrot.slane %v117, 1
    %v119 = vadd.f32 %v117, %v118
    %v120 = vsel %vm77, %v74, 0.0
    %v121 = vrot.slane %v120, 4
    %v122 = vadd.f32 %v120, %v121
    %v123 = vrot.slane %v122, 2
    %v124 = vadd.f32 %v122, %v123
    %v125 = vrot.slane %v124, 1
    %v126 = vadd.f32 %v124, %v125
    %v127 = vsel %vm77, %v75, 0.0
    %v128 = vrot.slane %v127, 4
    %v129 = vadd.f32 %v127, %v128
    %v130 = vrot.slane %v129, 2
    %v131 = vadd.f32 %v129, %v130
    %v132 = vrot.slane %v131, 1
    %v133 = vadd.f32 %v131, %v132
    %vm142 = vcmask 1041409
    %v143 = vsel %vm142, %v91, %v84
    %vm144 = vcmask 1042434
    %v145 = vsel %vm144, %v98, %v143
    %vm146 = vcmask 1043459
    %v147 = vsel %vm146, %v105, %v145
    %vm148 = vcmask 1044484
    %v149 = vsel %vm148, %v112, %v147
    %vm150 = vcmask 1045509
    %v151 = vsel %vm150, %v119, %v149
    %vm152 = vcmask 1046534
    %v153 = vsel %vm152, %v126, %v151
    %vm154 = vcmask 1047559
    %v155 = vsel %vm154, %v133, %v153
    %v157 = vadd.f32 %v76, %v155
    %158 = vst.msk [vmem:[#allocation2] sm:$0xff] %vm77, %v157
    // Predicated region
    $region38: #{tpu_custom_call.1} parent=1 // pred_check
      %p159 = pneg %p62
    $region39: #{tpu_custom_call.1} parent=1 // pred_check_branch
      %161 = sbr.rel (%p159) target = $region41
    $region40: #{tpu_custom_call.1} parent=1 // pred_region
      %v162 = vld [vmem:[#allocation2] sm:$0xff]
      %v163 = vmul.f32 %v162, 0.125
      %v164 = vld [vmem:[#allocation6] sm:$0xff]
      %v165 = vld [vmem:[#allocation6 + $0x8] sm:$0xff]
      %v166 = vld [vmem:[#allocation6 + $0x10] sm:$0xff]
      %v167 = vld [vmem:[#allocation6 + $0x18] sm:$0xff]
      %v168 = vld [vmem:[%s2] sm:$0x1]
      %v170 = vlaneseq
      %v171 = vshrl.u32 %v170, 7
      %v172 = vsub.s32 0, %v171
      %v173 = vrot.slane %v168, %v172
      %v176 = vsel %vm77, %v163, 0
      %178 = vmatprep.subr.mxu0 0.0
      %179 = vmatpush1.msra.mxu0 %v164
      %180 = vmatprep.subr.mxu0 0.0
      %181 = vmatpush1.msra.mxu0 %v165
      %182 = vmatprep.subr.mxu0 0.0
      %183 = vmatpush1.msra.mxu0 %v166
      %184 = vmatprep.subr.mxu0 0.0
      %185 = vmatpush1.msra.mxu0 %v167
      %186 = vmatprep.subr.mxu0 0.0
      %187 = vmatpush1.msra.mxu0 0.0
      %188 = vmatprep.subr.mxu0 0.0
      %189 = vmatpush1.msra.mxu0 0.0
      %190 = vmatprep.subr.mxu0 0.0
      %191 = vmatpush1.msra.mxu0 0.0
      %192 = vmatprep.subr.mxu0 0.0
      %193 = vmatpush1.msra.mxu0 0.0
      %194 = vmatprep.subr.mxu0 0.0
      %195 = vmatpush1.msra.mxu0 0.0
      %196 = vmatprep.subr.mxu0 0.0
      %197 = vmatpush1.msra.mxu0 0.0
      %198 = vmatprep.subr.mxu0 0.0
      %199 = vmatpush1.msra.mxu0 0.0
      %200 = vmatprep.subr.mxu0 0.0
      %201 = vmatpush1.msra.mxu0 0.0
      %202 = vmatprep.subr.mxu0 0.0
      %203 = vmatpush1.msra.mxu0 0.0
      %204 = vmatprep.subr.mxu0 0.0
      %205 = vmatpush1.msra.mxu0 0.0
      %206 = vmatprep.subr.mxu0 0.0
      %207 = vmatpush1.msra.mxu0 0.0
      %208 = vmatprep.subr.mxu0 0.0
      %209 = vmatpush1.msra.mxu0 0.0
      %210 = vmatprep.subr.mxu0 0.0
      %211 = vmatpush1.msra.mxu0 0.0
      %212 = vmatprep.subr.mxu0 0.0
      %213 = vmatpush1.msra.mxu0 0.0
      %214 = vmatprep.subr.mxu0 0.0
      %215 = vmatpush1.msra.mxu0 0.0
      %216 = vmatprep.subr.mxu0 0.0
      %217 = vmatpush1.msra.mxu0 0.0
      %218 = vmatprep.subr.mxu0 0.0
      %219 = vmatpush1.msra.mxu0 0.0
      %220 = vmatprep.subr.mxu0 0.0
      %221 = vmatpush1.msra.mxu0 0.0
      %222 = vmatprep.subr.mxu0 0.0
      %223 = vmatpush1.msra.mxu0 0.0
      %224 = vmatprep.subr.mxu0 0.0
      %225 = vmatpush1.msra.mxu0 0.0
      %226 = vmatprep.subr.mxu0 0.0
      %227 = vmatpush1.msra.mxu0 0.0
      %228 = vmatprep.subr.mxu0 0.0
      %229 = vmatpush1.msra.mxu0 0.0
      %230 = vmatprep.subr.mxu0 0.0
      %231 = vmatpush1.msra.mxu0 0.0
      %232 = vmatprep.subr.mxu0 0.0
      %233 = vmatpush1.msra.mxu0 0.0
      %234 = vmatprep.subr.mxu0 0.0
      %235 = vmatpush1.msra.mxu0 0.0
      %236 = vmatprep.subr.mxu0 0.0
      %237 = vmatpush1.msra.mxu0 0.0
      %238 = vmatprep.subr.mxu0 0.0
      %239 = vmatpush1.msra.mxu0 0.0
      %240 = vmatprep.subr.mxu0 0.0
      %241 = vmatpush1.msra.mxu0 0.0
      %242 = vmatprep.mubr.f32.mxu0 0.0
      %243 = vmatmul.mubr.f32.gmra.mrb[0].mxu0 %v176
      %v244 = vpop.f32.mrb[0].mxu0
      %v245 = vadd.f32 %v173, %v244
      %v246 = vpop.f32.mrb[0].mxu0
      %247 = vdwg.mxu0
      %v248 = vtanh.pop %v245
      %v249 = vld [vmem:[#allocation8] sm:$0xff]
      %v250 = vld [vmem:[#allocation8 + $0x8] sm:$0xff]
      %v251 = vld [vmem:[#allocation8 + $0x10] sm:$0xff]
      %v252 = vld [vmem:[#allocation8 + $0x18] sm:$0xff]
      %v253 = vld [vmem:[%s4] sm:$0x1]
      %v255 = vlaneseq
      %v256 = vshrl.u32 %v255, 7
      %v257 = vsub.s32 0, %v256
      %v258 = vrot.slane %v253, %v257
      %v261 = vsel %vm77, %v248, 0
      %263 = vmatprep.subr.mxu0 0.0
      %264 = vmatpush1.msra.mxu0 %v249
      %265 = vmatprep.subr.mxu0 0.0
      %266 = vmatpush1.msra.mxu0 %v250
      %267 = vmatprep.subr.mxu0 0.0
      %268 = vmatpush1.msra.mxu0 %v251
      %269 = vmatprep.subr.mxu0 0.0
      %270 = vmatpush1.msra.mxu0 %v252
      %271 = vmatprep.subr.mxu0 0.0
      %272 = vmatpush1.msra.mxu0 0.0
      %273 = vmatprep.subr.mxu0 0.0
      %274 = vmatpush1.msra.mxu0 0.0
      %275 = vmatprep.subr.mxu0 0.0
      %276 = vmatpush1.msra.mxu0 0.0
      %277 = vmatprep.subr.mxu0 0.0
      %278 = vmatpush1.msra.mxu0 0.0
      %279 = vmatprep.subr.mxu0 0.0
      %280 = vmatpush1.msra.mxu0 0.0
      %281 = vmatprep.subr.mxu0 0.0
      %282 = vmatpush1.msra.mxu0 0.0
      %283 = vmatprep.subr.mxu0 0.0
      %284 = vmatpush1.msra.mxu0 0.0
      %285 = vmatprep.subr.mxu0 0.0
      %286 = vmatpush1.msra.mxu0 0.0
      %287 = vmatprep.subr.mxu0 0.0
      %288 = vmatpush1.msra.mxu0 0.0
      %289 = vmatprep.subr.mxu0 0.0
      %290 = vmatpush1.msra.mxu0 0.0
      %291 = vmatprep.subr.mxu0 0.0
      %292 = vmatpush1.msra.mxu0 0.0
      %293 = vmatprep.subr.mxu0 0.0
      %294 = vmatpush1.msra.mxu0 0.0
      %295 = vmatprep.subr.mxu0 0.0
      %296 = vmatpush1.msra.mxu0 0.0
      %297 = vmatprep.subr.mxu0 0.0
      %298 = vmatpush1.msra.mxu0 0.0
      %299 = vmatprep.subr.mxu0 0.0
      %300 = vmatpush1.msra.mxu0 0.0
      %301 = vmatprep.subr.mxu0 0.0
      %302 = vmatpush1.msra.mxu0 0.0
      %303 = vmatprep.subr.mxu0 0.0
      %304 = vmatpush1.msra.mxu0 0.0
      %305 = vmatprep.subr.mxu0 0.0
      %306 = vmatpush1.msra.mxu0 0.0
      %307 = vmatprep.subr.mxu0 0.0
      %308 = vmatpush1.msra.mxu0 0.0
      %309 = vmatprep.subr.mxu0 0.0
      %310 = vmatpush1.msra.mxu0 0.0
      %311 = vmatprep.subr.mxu0 0.0
      %312 = vmatpush1.msra.mxu0 0.0
      %313 = vmatprep.subr.mxu0 0.0
      %314 = vmatpush1.msra.mxu0 0.0
      %315 = vmatprep.subr.mxu0 0.0
      %316 = vmatpush1.msra.mxu0 0.0
      %317 = vmatprep.subr.mxu0 0.0
      %318 = vmatpush1.msra.mxu0 0.0
      %319 = vmatprep.subr.mxu0 0.0
      %320 = vmatpush1.msra.mxu0 0.0
      %321 = vmatprep.subr.mxu0 0.0
      %322 = vmatpush1.msra.mxu0 0.0
      %323 = vmatprep.subr.mxu0 0.0
      %324 = vmatpush1.msra.mxu0 0.0
      %325 = vmatprep.subr.mxu0 0.0
      %326 = vmatpush1.msra.mxu0 0.0
      %327 = vmatprep.mubr.f32.mxu0 0.0
      %328 = vmatmul.mubr.f32.gmra.mrb[0].mxu0 %v261
      %v329 = vpop.f32.mrb[0].mxu0
      %v330 = vadd.f32 %v258, %v329
      %v331 = vpop.f32.mrb[0].mxu0
      %332 = vdwg.mxu0
      %333 = vst [vmem:[#allocation9] sm:$0xff] %v330
    $region41: #{tpu_custom_call.1} parent=1 // pred_fallthru
      _
    // Predicated region
    $region42: #{tpu_custom_call.1} parent=1 // pred_check
      _
    $region43: #{tpu_custom_call.1} parent=1 // pred_check_branch
      %335 = sbr.rel (0) target = $region45
    $region44: #{tpu_custom_call.1} parent=1 // pred_region
      %s337 = ssub.s32 128, 32
      %338 = vsyncadd [#allocation5], %s337
      %s339 = sshll.u32 [#allocation9], 4
      %s340 = int_to_ptr.vmem [resolvable:$true] %s339
      %345 = dma.vmem_to_hbm [thread:$0]  %s340, 32, %s5, [#allocation5], 32, 32, 2
    $region45: #{tpu_custom_call.1} parent=1 // pred_fallthru
      _
    // Predicated region
    $region46: #{tpu_custom_call.1} parent=1 // pred_check
      _
    $region47: #{tpu_custom_call.1} parent=1 // pred_check_branch
      %347 = sbr.rel (0) target = $region49
    $region48: #{tpu_custom_call.1} parent=1 // pred_region
      %348 = dma.done [#allocation5], 128
    $region49: #{tpu_custom_call.1} parent=1 // pred_fallthru
      _
    %349 = vsyncpa [#allocation4], 1
    %350 = vsyncpa [#allocation7], 1
    %351 = vsyncpa [#allocation5], 1

</llo_original>
